<compile_context>
chip_gen: v5e
topology: v5e:2x2
jax: 0.10.0
libtpu: 0.0.40
codegen_flags: <defaults>
</compile_context>

<pallas_src>
import math

import jax
import jax.numpy as jnp
from jax.experimental import pallas as pl
from jax.experimental.pallas import tpu as pltpu


def _round_up(x, m):
    return ((x + m - 1) // m) * m


def _vmem_cap_bytes():
    """Generation-aware VMEM budget (0.75 * physical), v7x-safe fallback."""
    try:
        info = pltpu.get_tpu_info()
        cap = getattr(info, "vmem_capacity_bytes", None)
        if cap:
            return int(0.75 * cap)
    except Exception:
        pass
    return 48 << 20  # safe for v7x (64 MiB per TensorCore)


def _pick_tile(dim_aligned, align, t_max):
    """Pick a tile size (multiple of `align`, <= t_max).

    Minimize the number of blocks first (less re-streaming of the other
    operand), then the padded extent, then prefer the largest tile.  For dims
    that already have a good divisor (e.g. N=384 with t_max=512) this picks
    the exact divisor and introduces zero padding.
    """
    t_cap = max(align, min(t_max, dim_aligned))
    t_cap = (t_cap // align) * align
    best_key, best_t = None, align
    for t in range(align, t_cap + 1, align):
        blocks = -(-dim_aligned // t)
        padded = blocks * t
        key = (blocks, padded, -t)
        if best_key is None or key < best_key:
            best_key, best_t = key, t
    return best_t


def _linear_kernel_inplace(x_ref, w_ref, b_ref, o_ref):
    # f32 output: accumulate directly into the resident output block.
    # x_ref: (tm, tk)  w_ref: (tk, tn)  b_ref: (1, tn)  o_ref: (tm, tn) f32
    k = pl.program_id(2)

    @pl.when(k == 0)
    def _init():
        # Fold the bias add into accumulator init (no extra epilogue pass).
        o_ref[...] = jnp.broadcast_to(
            b_ref[...].astype(o_ref.dtype), o_ref.shape
        )

    o_ref[...] += jnp.dot(
        x_ref[...], w_ref[...], preferred_element_type=jnp.float32
    )


def _linear_kernel_acc(x_ref, w_ref, b_ref, o_ref, acc_ref):
    # Non-f32 output: keep an f32 VMEM scratch accumulator, single final cast.
    k = pl.program_id(2)

    @pl.when(k == 0)
    def _init():
        acc_ref[...] = jnp.broadcast_to(
            b_ref[...].astype(jnp.float32), acc_ref.shape
        )

    acc_ref[...] += jnp.dot(
        x_ref[...], w_ref[...], preferred_element_type=jnp.float32
    )

    @pl.when(k == pl.num_programs(2) - 1)
    def _store():
        o_ref[...] = acc_ref[...].astype(o_ref.dtype)


def _linear_aligned(x_p, w_p, b_p, *, tm_max=512, tn_max=512, tk_max=1024,
                    compute_dtype=None):
    """y_pad = x_p @ w_p + b_p on (8,128)-aligned, zero-padded operands."""
    M_al, K_al = x_p.shape
    K2, N_al = w_p.shape
    assert K_al == K2, (K_al, K2)
    assert b_p.shape == (1, N_al), b_p.shape

    out_dtype = x_p.dtype
    if compute_dtype is not None:
        x_p = x_p.astype(compute_dtype)
        w_p = w_p.astype(compute_dtype)

    # Tiles chosen against the *aligned* dims (divisor-aware, no waste when a
    # 128/8-multiple divisor exists).  NOTE(v7x megacore): if M_al and N_al
    # both fit in a single tile the M x N grid collapses to one block and one
    # TensorCore idles; acceptable here since such shapes are tiny.
    tm = _pick_tile(M_al, 8, tm_max)
    tn = _pick_tile(N_al, 128, tn_max)
    tk = _pick_tile(K_al, 128, tk_max)

    M_pad = _round_up(M_al, tm)
    N_pad = _round_up(N_al, tn)
    K_pad = _round_up(K_al, tk)

    # Only pad further if a dim has no good divisor (rare); zeros along K are
    # sound, padded M rows / N cols are sliced off by the caller.
    if (M_pad, K_pad) != (M_al, K_al):
        x_p = jnp.pad(x_p, ((0, M_pad - M_al), (0, K_pad - K_al)))
    if (K_pad, N_pad) != (K_al, N_al):
        w_p = jnp.pad(w_p, ((0, K_pad - K_al), (0, N_pad - N_al)))
    if N_pad != N_al:
        b_p = jnp.pad(b_p, ((0, 0), (0, N_pad - N_al)))

    grid = (M_pad // tm, N_pad // tn, K_pad // tk)
    gm, gn, _ = grid

    in_itemsize = jnp.dtype(x_p.dtype).itemsize
    out_itemsize = jnp.dtype(out_dtype).itemsize
    use_scratch = jnp.dtype(out_dtype) != jnp.dtype(jnp.float32)

    # Double-buffered x/w/bias tiles + resident output tile (+ f32 scratch
    # only for non-f32 outputs); generation-aware cap with 2x slack.
    vmem_est = (
        2 * (tm * tk + tk * tn + 8 * tn) * in_itemsize
        + 2 * tm * tn * out_itemsize
        + (tm * tn * 4 if use_scratch else 0)
    )
    vmem_limit = int(min(max(2 * vmem_est, 8 << 20), _vmem_cap_bytes()))

    # bytes_accessed reflects actual re-streaming: A is read once per N block,
    # B once per M block, C written once.
    cost = pl.CostEstimate(
        flops=2 * M_pad * K_pad * N_pad,
        transcendentals=0,
        bytes_accessed=(
            in_itemsize * (gn * M_pad * K_pad + gm * K_pad * N_pad)
            + out_itemsize * M_pad * N_pad
        ),
    )

    kernel = _linear_kernel_acc if use_scratch else _linear_kernel_inplace
    scratch = [pltpu.VMEM((tm, tn), jnp.float32)] if use_scratch else []

    out_p = pl.pallas_call(
        kernel,
        out_shape=jax.ShapeDtypeStruct((M_pad, N_pad), out_dtype),
        grid=grid,
        in_specs=[
            pl.BlockSpec((tm, tk), lambda i, j, k: (i, k)),
            pl.BlockSpec((tk, tn), lambda i, j, k: (k, j)),
            pl.BlockSpec((1, tn), lambda i, j, k: (0, j)),
        ],
        out_specs=pl.BlockSpec((tm, tn), lambda i, j, k: (i, j)),
        scratch_shapes=scratch,
        compiler_params=pltpu.CompilerParams(
            dimension_semantics=("parallel", "parallel", "arbitrary"),
            vmem_limit_bytes=vmem_limit,
        ),
        cost_estimate=cost,
    )(x_p, w_p, b_p)
    return out_p


def new_linear(x, weight, bias, *, compute_dtype=None,
               tm_max=512, tn_max=512, tk_max=1024):
    """y = x @ weight + bias, matching newLinear.forward (F.linear(x, W.T, b))."""
    M, K = x.shape
    Kw, N = weight.shape
    assert K == Kw, (K, Kw)
    assert bias.shape == (N,), bias.shape

    M_al, K_al, N_al = _round_up(M, 8), _round_up(K, 128), _round_up(N, 128)

    x_p = x
    if (M_al, K_al) != (M, K):
        x_p = jnp.pad(x, ((0, M_al - M), (0, K_al - K)))
    w_p = weight
    if (K_al, N_al) != (K, N):
        w_p = jnp.pad(weight, ((0, K_al - K), (0, N_al - N)))
    b_p = bias.reshape(1, N)
    if N_al != N:
        b_p = jnp.pad(b_p, ((0, 0), (0, N_al - N)))

    out = _linear_aligned(x_p, w_p, b_p, tm_max=tm_max, tn_max=tn_max,
                          tk_max=tk_max, compute_dtype=compute_dtype)
    if out.shape != (M, N):
        out = out[:M, :N]
    return out


def init_params(key, in_features, out_features, dtype=jnp.float32):
    """Deterministic init matching newLinear.reset_parameters semantics.

    weight: kaiming_uniform_(a=sqrt(5)) on a (in_features, out_features) tensor
            -> PyTorch fan_in = size(1) = out_features, bound = 1/sqrt(fan_in)
    bias:   uniform(-1/sqrt(fan_in), 1/sqrt(fan_in)) with the same fan_in
    """
    kw, kb = jax.random.split(key)
    fan_in = out_features  # torch._calculate_fan_in_and_fan_out on (in, out)
    bound = 1.0 / math.sqrt(fan_in)
    weight = jax.random.uniform(
        kw, (in_features, out_features), dtype, minval=-bound, maxval=bound
    )
    bias = jax.random.uniform(
        kb, (out_features,), dtype, minval=-bound, maxval=bound
    )
    return weight, bias


class NewLinear:
    """Functional stand-in for the PyTorch newLinear module.

    Weight/bias are padded to (128-aligned) shapes exactly once at
    construction, so each forward pads only the activation (no full-weight
    HBM rewrite per call).
    """

    def __init__(self, key, in_features, out_features, dtype=jnp.float32,
                 compute_dtype=None):
        self.in_features = in_features
        self.out_features = out_features
        self.compute_dtype = compute_dtype
        self.weight, self.bias = init_params(key, in_features, out_features, dtype)

        K_al = _round_up(in_features, 128)
        N_al = _round_up(out_features, 128)
        w_p = self.weight
        if (K_al, N_al) != (in_features, out_features):
            w_p = jnp.pad(self.weight,
                          ((0, K_al - in_features), (0, N_al - out_features)))
        b_p = self.bias.reshape(1, out_features)
        if N_al != out_features:
            b_p = jnp.pad(b_p, ((0, 0), (0, N_al - out_features)))
        self._w_padded = w_p
        self._b_padded = b_p

    def __call__(self, x):
        M, K = x.shape
        assert K == self.in_features, (K, self.in_features)
        M_al = _round_up(M, 8)
        K_al = self._w_padded.shape[0]
        x_p = x
        if (M_al, K_al) != (M, K):
            x_p = jnp.pad(x, ((0, M_al - M), (0, K_al - K)))
        out = _linear_aligned(x_p, self._w_padded, self._b_padded,
                              compute_dtype=self.compute_dtype)
        if out.shape != (M, self.out_features):
            out = out[:M, :self.out_features]
        return out


if __name__ == "__main__":
    key = jax.random.PRNGKey(0)
    k_x, k_p, k2_x, k2_p = jax.random.split(key, 4)

    # --- Small shape consistent with the module (pre-padded-params path) ---
    batch, in_features, out_features = 8, 32, 64
    x = jax.random.normal(k_x, (batch, in_features), dtype=jnp.float32)
    layer = NewLinear(k_p, in_features, out_features)

    y = jax.block_until_ready(layer(x))
    y_ref = x @ layer.weight + layer.bias
    assert y.shape == (batch, out_features)
    assert jnp.allclose(y, y_ref, atol=1e-5, rtol=1e-5)

    # --- Larger shape exercising divisor-aware tiles (N=384 -> tn=384) ---
    M2, K2, N2 = 200, 1024, 384
    x2 = jax.random.normal(k2_x, (M2, K2), dtype=jnp.float32)
    w2, b2 = init_params(k2_p, K2, N2)

    y2 = jax.block_until_ready(new_linear(x2, w2, b2))
    y2_ref = x2 @ w2 + b2
    assert y2.shape == (M2, N2)
    assert jnp.allclose(y2, y2_ref, atol=1e-4, rtol=1e-4)

    print("KERNEL_OK")
</pallas_src>

<mosaic_0001>
module attributes {stable_mosaic.version = 11 : i64} {
  func.func @_linear_kernel_inplace(%arg0: i32, %arg1: i32, %arg2: i32, %arg3: memref<8x128xf32, #tpu.memory_space<vmem>>, %arg4: memref<128x128xf32, #tpu.memory_space<vmem>>, %arg5: memref<1x128xf32, #tpu.memory_space<vmem>>, %arg6: memref<8x128xf32, #tpu.memory_space<vmem>>) attributes {dimension_semantics = [#tpu.dimension_semantics<parallel>, #tpu.dimension_semantics<parallel>, #tpu.dimension_semantics<arbitrary>], iteration_bounds = array<i64: 1, 1, 1>, scalar_prefetch = 0 : i64, scratch_operands = 0 : i64, tpu.core_type = #tpu.core_type<tc>, window_params = [{transform_indices = @transform_0, window_bounds = array<i64: 8, 128>}, {transform_indices = @transform_1, window_bounds = array<i64: 128, 128>}, {transform_indices = @transform_2, window_bounds = array<i64: 1, 128>}, {transform_indices = @transform_3, window_bounds = array<i64: 8, 128>}]} {
    %c0_i32 = arith.constant 0 : i32
    %0 = arith.cmpi eq, %arg2, %c0_i32 : i32
    %1 = arith.extui %0 : i1 to i32
    %c0_i32_0 = arith.constant 0 : i32
    %2 = arith.cmpi ne, %1, %c0_i32_0 : i32
    scf.if %2 {
      %c0_8 = arith.constant 0 : index
      %c0_9 = arith.constant 0 : index
      %9 = vector.load %arg5[%c0_8, %c0_9] : memref<1x128xf32, #tpu.memory_space<vmem>>, vector<1x128xf32>
      %10 = vector.shape_cast %9 : vector<1x128xf32> to vector<1x128xf32>
      %11 = vector.broadcast %10 : vector<1x128xf32> to vector<8x128xf32>
      %c0_10 = arith.constant 0 : index
      %c0_11 = arith.constant 0 : index
      %12 = vector.load %arg6[%c0_10, %c0_11] : memref<8x128xf32, #tpu.memory_space<vmem>>, vector<8x128xf32>
      tpu.vector_store %arg6[%c0_10, %c0_11], %11 {strides = array<i32>} : memref<8x128xf32, #tpu.memory_space<vmem>>, vector<8x128xf32>,
    } else {
    }
    %c0 = arith.constant 0 : index
    %c0_1 = arith.constant 0 : index
    %3 = vector.load %arg6[%c0, %c0_1] : memref<8x128xf32, #tpu.memory_space<vmem>>, vector<8x128xf32>
    %c0_2 = arith.constant 0 : index
    %c0_3 = arith.constant 0 : index
    %4 = vector.load %arg3[%c0_2, %c0_3] : memref<8x128xf32, #tpu.memory_space<vmem>>, vector<8x128xf32>
    %c0_4 = arith.constant 0 : index
    %c0_5 = arith.constant 0 : index
    %5 = vector.load %arg4[%c0_4, %c0_5] : memref<128x128xf32, #tpu.memory_space<vmem>>, vector<128x128xf32>
    %cst = arith.constant dense<0.000000e+00> : vector<8x128xf32>
    %6 = tpu.matmul %4, %5, %cst {dimension_numbers = #tpu.dot_dimension_numbers<[1], [0], [0], [1], [0, 0, 1, 1], [], []>} : vector<8x128xf32>, vector<128x128xf32>, vector<8x128xf32> -> vector<8x128xf32>
    %7 = arith.addf %3, %6 : vector<8x128xf32>
    %c0_6 = arith.constant 0 : index
    %c0_7 = arith.constant 0 : index
    %8 = vector.load %arg6[%c0_6, %c0_7] : memref<8x128xf32, #tpu.memory_space<vmem>>, vector<8x128xf32>
    tpu.vector_store %arg6[%c0_6, %c0_7], %7 {strides = array<i32>} : memref<8x128xf32, #tpu.memory_space<vmem>>, vector<8x128xf32>,
    return
  }
  func.func @transform_0(%arg0: i32, %arg1: i32, %arg2: i32) -> (i32, i32) {
    %c0_i32 = arith.constant 0 : i32
    return %arg0, %arg2 : i32, i32
  }
  func.func @transform_1(%arg0: i32, %arg1: i32, %arg2: i32) -> (i32, i32) {
    %c0_i32 = arith.constant 0 : i32
    return %arg2, %arg1 : i32, i32
  }
  func.func @transform_2(%arg0: i32, %arg1: i32, %arg2: i32) -> (i32, i32) {
    %c0_i32 = arith.constant 0 : i32
    %c0_i32_0 = arith.constant 0 : i32
    return %c0_i32, %arg1 : i32, i32
  }
  func.func @transform_3(%arg0: i32, %arg1: i32, %arg2: i32) -> (i32, i32) {
    %c0_i32 = arith.constant 0 : i32
    return %arg0, %arg1 : i32, i32
  }
}

</mosaic_0001>

<llo_original>
// kernel: tpu_custom_call.1
$region0: #{tpu_custom_call.1}
  #allocation0 [shape = 'u32[]', space=smem, size = 0x4, offset = 0x4, fixed_abs, tag = 'smem constant byte address 0x4 - core index']
  #allocation1 [shape = 'u32[72,128]{1,0:T(1,128)}', space=vmem, size = 0x9000, scoped, tag = 'internal scratch']
  %s0 = inlined_call_operand.hbm [shape: f32[8,128], index: 0, kind: input, shape index: {}]
  %s1 = inlined_call_operand.hbm [shape: f32[128,128], index: 1, kind: input, shape index: {}]
  %s2 = inlined_call_operand.vmem [shape: f32[1,128], index: 2, kind: input, shape index: {}]
  %s3 = inlined_call_operand.hbm [shape: f32[8,128], index: 3, kind: output, shape index: {}]
  %s4 = sld [smem:[#allocation0]]
  $region34: #{tpu_custom_call.1} parent=0
    _
  %s6 = ssub.s32 1, %s4
  %s7 = scalar_select 0, %s6, %s4
  $region1: #{tpu_custom_call.1} parent=0
    #allocation2 [shape = 'u8[4096]{0}', space=vmem, size = 0x1000, scoped, tag = 'input window, operand 0, single buffered']
    #allocation3 [shape = 's32[1]{0}', space=sflag, size = 0x4, scoped, tag = 'scoped memory for tpu_custom_call.1']
    #allocation4 [shape = 's32[1]{0}', space=sflag, size = 0x4, scoped, tag = 'scoped memory for tpu_custom_call.1']
    #allocation5 [shape = 'u8[65536]{0}', space=vmem, size = 0x10000, scoped, tag = 'input window, operand 1, single buffered']
    #allocation6 [shape = 's32[1]{0}', space=sflag, size = 0x4, scoped, tag = 'scoped memory for tpu_custom_call.1']
    #allocation7 [shape = 'u8[4096]{0}', space=vmem, size = 0x1000, scoped, tag = 'output window, operand 0, single buffered']
    %8 = vsyncpa [#allocation3], 0
    %9 = vsyncpa [#allocation6], 0
    %10 = vsyncpa [#allocation4], 0
    // Predicated region
    $region2: #{tpu_custom_call.1} parent=1 // pred_check
      _
    $region3: #{tpu_custom_call.1} parent=1 // pred_check_branch
      %12 = sbr.rel (0) target = $region5
    $region4: #{tpu_custom_call.1} parent=1 // pred_region
      %14 = vsyncadd [#allocation3], 0
      %s16 = sshll.u32 %s0, 4
      %s17 = int_to_ptr.hbm [resolvable:$true] %s16
      %s18 = sshll.u32 [#allocation2], 4
      %s19 = int_to_ptr.vmem [resolvable:$true] %s18
      %21 = dma.hbm_to_vmem [thread:$0]  %s17, 128, %s19, [#allocation3]
    $region5: #{tpu_custom_call.1} parent=1 // pred_fallthru
      _
    // Predicated region
    $region6: #{tpu_custom_call.1} parent=1 // pred_check
      _
    $region7: #{tpu_custom_call.1} parent=1 // pred_check_branch
      %23 = sbr.rel (0) target = $region9
    $region8: #{tpu_custom_call.1} parent=1 // pred_region
      %25 = vsyncadd [#allocation6], 0
      %s26 = sshll.u32 %s1, 4
      %s27 = int_to_ptr.hbm [resolvable:$true] %s26
      %s28 = sshll.u32 [#allocation5], 4
      %s29 = int_to_ptr.vmem [resolvable:$true] %s28
      %34 = dma.hbm_to_vmem [thread:$0]  %s27, 2048, %s29, [#allocation6], 128, 128, 8
    $region9: #{tpu_custom_call.1} parent=1 // pred_fallthru
      _
    // Predicated region
    $region10: #{tpu_custom_call.1} parent=1 // pred_check
      _
    $region11: #{tpu_custom_call.1} parent=1 // pred_check_branch
      %36 = sbr.rel (0) target = $region13
    $region12: #{tpu_custom_call.1} parent=1 // pred_region
      _
    $region13: #{tpu_custom_call.1} parent=1 // pred_fallthru
      _
    // Predicated region
    $region14: #{tpu_custom_call.1} parent=1 // pred_check
      _
    $region15: #{tpu_custom_call.1} parent=1 // pred_check_branch
      %38 = sbr.rel (0) target = $region17
    $region16: #{tpu_custom_call.1} parent=1 // pred_region
      %40 = dma.done [#allocation3], 128
    $region17: #{tpu_custom_call.1} parent=1 // pred_fallthru
      _
    // Predicated region
    $region18: #{tpu_custom_call.1} parent=1 // pred_check
      _
    $region19: #{tpu_custom_call.1} parent=1 // pred_check_branch
      %42 = sbr.rel (0) target = $region21
    $region20: #{tpu_custom_call.1} parent=1 // pred_region
      %44 = dma.done [#allocation6], 2048
    $region21: #{tpu_custom_call.1} parent=1 // pred_fallthru
      _
    %p45 = scmp.eq.s32.totalorder 0, 0
    // Predicated region
    $region22: #{tpu_custom_call.1} parent=1 // pred_check
      %p46 = pneg %p45
    $region23: #{tpu_custom_call.1} parent=1 // pred_check_branch
      %48 = sbr.rel (%p46) target = $region25
    $region24: #{tpu_custom_call.1} parent=1 // pred_region
      %v49 = vld [vmem:[%s2] sm:$0x1]
      %v51 = vperm.slane %v49, 0
      %53 = vst [vmem:[#allocation7] sm:$0xff] %v51
    $region25: #{tpu_custom_call.1} parent=1 // pred_fallthru
      _
    %v54 = vld [vmem:[#allocation7] sm:$0xff]
    %v55 = vld [vmem:[#allocation2] sm:$0xff]
    %v56 = vld [vmem:[#allocation5] sm:$0xff]
    %v57 = vld [vmem:[#allocation5 + $0x8] sm:$0xff]
    %v58 = vld [vmem:[#allocation5 + $0x10] sm:$0xff]
    %v59 = vld [vmem:[#allocation5 + $0x18] sm:$0xff]
    %v60 = vld [vmem:[#allocation5 + $0x20] sm:$0xff]
    %v61 = vld [vmem:[#allocation5 + $0x28] sm:$0xff]
    %v62 = vld [vmem:[#allocation5 + $0x30] sm:$0xff]
    %v63 = vld [vmem:[#allocation5 + $0x38] sm:$0xff]
    %v64 = vld [vmem:[#allocation5 + $0x40] sm:$0xff]
    %v65 = vld [vmem:[#allocation5 + $0x48] sm:$0xff]
    %v66 = vld [vmem:[#allocation5 + $0x50] sm:$0xff]
    %v67 = vld [vmem:[#allocation5 + $0x58] sm:$0xff]
    %v68 = vld [vmem:[#allocation5 + $0x60] sm:$0xff]
    %v69 = vld [vmem:[#allocation5 + $0x68] sm:$0xff]
    %v70 = vld [vmem:[#allocation5 + $0x70] sm:$0xff]
    %v71 = vld [vmem:[#allocation5 + $0x78] sm:$0xff]
    %72 = vmatpush.msra.mxu0 %v71
    %73 = vmatpush.msra.mxu0 %v70
    %74 = vmatpush.msra.mxu0 %v69
    %75 = vmatpush.msra.mxu0 %v68
    %76 = vmatpush.msra.mxu0 %v67
    %77 = vmatpush.msra.mxu0 %v66
    %78 = vmatpush.msra.mxu0 %v65
    %79 = vmatpush.msra.mxu0 %v64
    %80 = vmatpush.msra.mxu0 %v63
    %81 = vmatpush.msra.mxu0 %v62
    %82 = vmatpush.msra.mxu0 %v61
    %83 = vmatpush.msra.mxu0 %v60
    %84 = vmatpush.msra.mxu0 %v59
    %85 = vmatpush.msra.mxu0 %v58
    %86 = vmatpush.msra.mxu0 %v57
    %87 = vmatpush.msra.mxu0 %v56
    %88 = vmatmul.f32.gmra.mxu0 %v55
    %v89 = vpop.f32.mrf.mxu0
    %v90 = vadd.f32 0.0, %v89
    %91 = vdwg.mxu0
    %v92 = vadd.f32 %v54, %v90
    %93 = vst [vmem:[#allocation7] sm:$0xff] %v92
    // Predicated region
    $region26: #{tpu_custom_call.1} parent=1 // pred_check
      _
    $region27: #{tpu_custom_call.1} parent=1 // pred_check_branch
      %95 = sbr.rel (0) target = $region29
    $region28: #{tpu_custom_call.1} parent=1 // pred_region
      %97 = vsyncadd [#allocation4], 0
      %s99 = sshll.u32 [#allocation7], 4
      %s100 = int_to_ptr.vmem [resolvable:$true] %s99
      %s101 = sshll.u32 %s3, 4
      %s102 = int_to_ptr.hbm [resolvable:$true] %s101
      %104 = dma.vmem_to_hbm [thread:$0]  %s100, 128, %s102, [#allocation4]
    $region29: #{tpu_custom_call.1} parent=1 // pred_fallthru
      _
    // Predicated region
    $region30: #{tpu_custom_call.1} parent=1 // pred_check
      _
    $region31: #{tpu_custom_call.1} parent=1 // pred_check_branch
      %106 = sbr.rel (0) target = $region33
    $region32: #{tpu_custom_call.1} parent=1 // pred_region
      %108 = dma.done [#allocation4], 128
    $region33: #{tpu_custom_call.1} parent=1 // pred_fallthru
      _
    %109 = vsyncpa [#allocation3], 1
    %110 = vsyncpa [#allocation6], 1
    %111 = vsyncpa [#allocation4], 1

</llo_original>
